<compile_context>
chip_gen: v7x
topology: tpu7x:2x2x1
jax: 0.10.0
libtpu: 0.0.40
codegen_flags: <defaults>
</compile_context>

<pallas_src>
import functools
import math

import jax
import jax.numpy as jnp
from jax import lax
from jax.experimental import pallas as pl
from jax.experimental.pallas import tpu as pltpu


def _relation_graph_kernel(x_ref, w_ref, g_ref, o_ref, lhs_ref, rhs_ref, *,
                           n_heads, head_dim, n_classes, scale, q_tile,
                           compute_dtype):
    """Grid step = (batch-block bb, query-tile qi).  Scratch persists across qi."""
    H, Dh, C = n_heads, head_dim, n_classes
    NB, N, _ = x_ref.shape
    qi = pl.program_id(1)

    # ---------- build phase: once per image block (first query tile) ----------
    @pl.when(qi == 0)
    def _build():
        w = w_ref[...].astype(compute_dtype)            # (Din, 2*H*Dh + C) fused Wq|Wk|Wc^T
        g = g_ref[...].astype(compute_dtype)            # (C, H*C) per-head mixed prior graphs
        for nb in range(NB):                            # static unroll over folded images
            xb = x_ref[nb].astype(compute_dtype)        # (N, Din)
            # ONE fused MXU pass: q (all heads) | k (all heads) | class logits
            proj = jnp.dot(xb, w, preferred_element_type=jnp.float32)
            q_all = proj[:, : H * Dh] * scale            # scale folded into lhs
            k_all = proj[:, H * Dh: 2 * H * Dh]
            logits = proj[:, 2 * H * Dh:]
            # soft class assignment -- exact reciprocal (error propagates quadratically
            # into the bias term), cost is a single (N,1) divide per image.
            logits = logits - jnp.max(logits, axis=-1, keepdims=True)
            el = jnp.exp(logits)
            p = el / jnp.sum(el, axis=-1, keepdims=True)                 # (N, C) f32
            # p @ G_h for ALL heads in one MXU pass
            pg_all = jnp.dot(p.astype(compute_dtype), g,
                             preferred_element_type=jnp.float32)         # (N, H*C)
            # scores+bias fusion operands, head on a LEADING axis (free per-head views)
            for h in range(H):
                lhs_ref[nb, h] = jnp.concatenate(
                    [q_all[:, h * Dh:(h + 1) * Dh],
                     pg_all[:, h * C:(h + 1) * C]], axis=-1).astype(compute_dtype)
                rhs_ref[nb, h] = jnp.concatenate(
                    [k_all[:, h * Dh:(h + 1) * Dh], p], axis=-1).astype(compute_dtype)

    # ---------- streaming phase: one query tile, per-head softmax, direct store ----------
    q0 = pl.multiple_of(qi * q_tile, q_tile)
    for nb in range(NB):
        for h in range(H):
            lhs = lhs_ref[nb, h, pl.ds(q0, q_tile), :]                   # (TQ, Dh+C)
            rhs = rhs_ref[nb, h]                                         # (N,  Dh+C)
            # ONE MXU dot per head = scores + bias (contract last axes, no transpose)
            s = lax.dot_general(lhs, rhs, (((1,), (1,)), ((), ())),
                                preferred_element_type=jnp.float32)      # (TQ, N)
            s = s - jnp.max(s, axis=-1, keepdims=True)
            es = jnp.exp(s)
            a = es * pl.reciprocal(jnp.sum(es, axis=-1, keepdims=True), approx=True)
            o_ref[nb, h] = a.astype(o_ref.dtype)


@functools.partial(jax.jit, static_argnames=("q_tile", "images_per_step",
                                             "compute_dtype", "out_dtype"))
def relation_graph_forward(x, wq, wk, class_weights, graphs, rel_mix, *,
                           q_tile=None, images_per_step=None,
                           compute_dtype=jnp.float32, out_dtype=jnp.float32):
    """x: [B, N, Din]; wq/wk: [H, Din, Dh]; class_weights: [C, Din];
    graphs: [C, C, R]; rel_mix: [H, R].  Returns new_A: [B, H, N, N] (out_dtype)."""
    B, N, Din = x.shape
    H, _, Dh = wq.shape
    C = class_weights.shape[0]

    # --- tiny wrapper-side glue (outside the kernel) ---
    # mix R relation graphs per head, lay per-head graphs side-by-side -> (C, H*C)
    mixed = jnp.einsum("ijr,hr->hij", graphs, rel_mix)                   # (H, C, C)
    g_all = jnp.transpose(mixed, (1, 0, 2)).reshape(C, H * C)
    # fuse per-head Q/K weights AND the class projection into one (Din, 2*H*Dh + C) slab
    w_q = jnp.transpose(wq, (1, 0, 2)).reshape(Din, H * Dh)
    w_k = jnp.transpose(wk, (1, 0, 2)).reshape(Din, H * Dh)
    w = jnp.concatenate([w_q, w_k, class_weights.T], axis=1)

    # --- tiling choices ---
    if q_tile is None:
        q_tile = N if N <= 256 else (256 if N % 256 == 0 else N)        # TQ | N, mult of 8
    if N % q_tile != 0:
        q_tile = N
    nq = N // q_tile
    if images_per_step is None:
        # toy shapes: fold the whole batch into one grid step (per-step overhead dominates);
        # production shapes: one image per step so the out block stays VMEM-friendly.
        images_per_step = B if (B * H * N * N * 4) <= (1 << 21) else 1
    if B % images_per_step != 0:
        images_per_step = 1
    NB = images_per_step

    kernel = functools.partial(
        _relation_graph_kernel,
        n_heads=H, head_dim=Dh, n_classes=C,
        scale=1.0 / math.sqrt(Dh), q_tile=q_tile, compute_dtype=compute_dtype)

    return pl.pallas_call(
        kernel,
        out_shape=jax.ShapeDtypeStruct((B, H, N, N), out_dtype),
        grid_spec=pltpu.PrefetchScalarGridSpec(
            num_scalar_prefetch=0,
            grid=(B // NB, nq),
            in_specs=[
                pl.BlockSpec((NB, N, Din), lambda bb, qi: (bb, 0, 0)),           # x block
                pl.BlockSpec((Din, 2 * H * Dh + C), lambda bb, qi: (0, 0)),      # Wq|Wk|Wc^T
                pl.BlockSpec((C, H * C), lambda bb, qi: (0, 0)),                 # mixed graphs
            ],
            out_specs=pl.BlockSpec((NB, H, q_tile, N), lambda bb, qi: (bb, 0, qi, 0)),
            scratch_shapes=[
                pltpu.VMEM((NB, H, N, Dh + C), compute_dtype),   # lhs_all = [q*scale | p@G_h]
                pltpu.VMEM((NB, H, N, Dh + C), compute_dtype),   # rhs_all = [k | p]
            ],
        ),
        compiler_params=pltpu.CompilerParams(
            # batch axis parallel (v7x megacore); query-tile axis carries per-image scratch.
            dimension_semantics=("parallel", "arbitrary"),
        ),
    )(x, w, g_all)


def _reference(x, wq, wk, class_weights, graphs, rel_mix):
    """Plain-JAX reference for correctness checking."""
    Dh = wq.shape[-1]
    mixed = jnp.einsum("ijr,hr->hij", graphs, rel_mix)                   # (H, C, C)
    q = jnp.einsum("bnd,hde->bhne", x, wq)
    k = jnp.einsum("bnd,hde->bhne", x, wk)
    scores = jnp.einsum("bhne,bhme->bhnm", q, k) / math.sqrt(Dh)
    p = jax.nn.softmax(jnp.einsum("bnd,cd->bnc", x, class_weights), axis=-1)
    bias = jnp.einsum("bnc,hcd,bmd->bhnm", p, mixed, p)
    return jax.nn.softmax(scores + bias, axis=-1)


if __name__ == "__main__":
    # small, module-consistent shapes
    B = 2        # batch_per_gpu
    N = 8        # n_nodes (ROI_HEADS.BATCH_SIZE_PER_IMAGE)
    Din = 32     # node_in
    Dh = 16      # rel_graph_embed_dim per head
    H = 2        # num_heads
    C = 16       # number of object classes in the relation graphs
    R = 3        # len(REL_TYPES): co-occurence, spatial-relations, relative-distance

    key = jax.random.PRNGKey(0)
    kx, kq, kk, kc, kg, km = jax.random.split(key, 6)

    x = jax.random.normal(kx, (B, N, Din), dtype=jnp.float32)
    wq = jax.random.normal(kq, (H, Din, Dh), dtype=jnp.float32) * 0.1
    wk = jax.random.normal(kk, (H, Din, Dh), dtype=jnp.float32) * 0.1
    # synthetic stand-in for torch.load(COCO_final_layer)['weight'][1:]
    class_weights = jax.random.normal(kc, (C, Din), dtype=jnp.float32) * 0.1
    # synthetic stand-in for the JSON relation graphs (non-negative prior strengths)
    graphs = jax.nn.sigmoid(jax.random.normal(kg, (C, C, R), dtype=jnp.float32))
    rel_mix = jax.random.normal(km, (H, R), dtype=jnp.float32) * 0.5

    ref = _reference(x, wq, wk, class_weights, graphs, rel_mix)

    # f32 path (tight tolerance; only the final-softmax reciprocal is approximate)
    out = relation_graph_forward(x, wq, wk, class_weights, graphs, rel_mix)
    out = jax.block_until_ready(out)
    assert out.shape == (B, H, N, N)
    assert jnp.allclose(out, ref, atol=2e-3, rtol=2e-3)

    # bf16 MXU-input / bf16-output path (production regime on v6e/v7x), loose tolerance
    out_bf16 = relation_graph_forward(x, wq, wk, class_weights, graphs, rel_mix,
                                      compute_dtype=jnp.bfloat16, out_dtype=jnp.bfloat16)
    out_bf16 = jax.block_until_ready(out_bf16)
    assert out_bf16.shape == (B, H, N, N)
    assert jnp.allclose(out_bf16.astype(jnp.float32), ref, atol=5e-2, rtol=5e-2)

    print("KERNEL_OK")
</pallas_src>

<mosaic_0001>
module attributes {stable_mosaic.version = 11 : i64} {
  func.func @_relation_graph_kernel(%arg0: i32, %arg1: i32, %arg2: memref<2x8x32xf32, #tpu.memory_space<vmem>>, %arg3: memref<32x80xf32, #tpu.memory_space<vmem>>, %arg4: memref<16x32xf32, #tpu.memory_space<vmem>>, %arg5: memref<2x2x8x8xf32, #tpu.memory_space<vmem>>, %arg6: memref<2x2x8x32xf32, #tpu.memory_space<vmem>>, %arg7: memref<2x2x8x32xf32, #tpu.memory_space<vmem>>) attributes {dimension_semantics = [#tpu.dimension_semantics<parallel>, #tpu.dimension_semantics<arbitrary>], iteration_bounds = array<i64: 1, 1>, scalar_prefetch = 0 : i64, scratch_operands = 2 : i64, tpu.core_type = #tpu.core_type<tc>, window_params = [{transform_indices = @transform_0, window_bounds = array<i64: 2, 8, 32>}, {pipeline_mode = #tpu.pipeline_mode<synchronous>, transform_indices = @transform_1, window_bounds = array<i64: 32, 80>}, {pipeline_mode = #tpu.pipeline_mode<synchronous>, transform_indices = @transform_2, window_bounds = array<i64: 16, 32>}, {transform_indices = @transform_3, window_bounds = array<i64: 2, 2, 8, 8>}]} {
    %c0_i32 = arith.constant 0 : i32
    %0 = arith.cmpi eq, %arg1, %c0_i32 : i32
    %1 = arith.extui %0 : i1 to i32
    %c0_i32_0 = arith.constant 0 : i32
    %2 = arith.cmpi ne, %1, %c0_i32_0 : i32
    scf.if %2 {
      %c0_54 = arith.constant 0 : index
      %c0_55 = arith.constant 0 : index
      %81 = vector.load %arg3[%c0_54, %c0_55] : memref<32x80xf32, #tpu.memory_space<vmem>>, vector<32x80xf32>
      %c0_56 = arith.constant 0 : index
      %c0_57 = arith.constant 0 : index
      %82 = vector.load %arg4[%c0_56, %c0_57] : memref<16x32xf32, #tpu.memory_space<vmem>>, vector<16x32xf32>
      %c0_58 = arith.constant 0 : index
      %c0_59 = arith.constant 0 : index
      %c0_60 = arith.constant 0 : index
      %83 = vector.load %arg2[%c0_58, %c0_59, %c0_60] : memref<2x8x32xf32, #tpu.memory_space<vmem>>, vector<1x8x32xf32>
      %84 = vector.shape_cast %83 : vector<1x8x32xf32> to vector<8x32xf32>
      %cst_61 = arith.constant dense<0.000000e+00> : vector<8x80xf32>
      %85 = tpu.matmul %84, %81, %cst_61 {dimension_numbers = #tpu.dot_dimension_numbers<[1], [0], [0], [1], [0, 0, 1, 1], [], []>} : vector<8x32xf32>, vector<32x80xf32>, vector<8x80xf32> -> vector<8x80xf32>
      %86 = vector.extract_strided_slice %85 {offsets = [0, 0], sizes = [8, 32], strides = [1, 1]} : vector<8x80xf32> to vector<8x32xf32>
      %cst_62 = arith.constant 2.500000e-01 : f32
      %87 = vector.broadcast %cst_62 : f32 to vector<8x32xf32>
      %88 = arith.mulf %86, %87 : vector<8x32xf32>
      %89 = vector.extract_strided_slice %85 {offsets = [0, 32], sizes = [8, 32], strides = [1, 1]} : vector<8x80xf32> to vector<8x32xf32>
      %90 = vector.extract_strided_slice %85 {offsets = [0, 64], sizes = [8, 16], strides = [1, 1]} : vector<8x80xf32> to vector<8x16xf32>
      %cst_63 = arith.constant dense<0xFF800000> : vector<8xf32>
      %91 = vector.multi_reduction <maximumf>, %90, %cst_63 [1] : vector<8x16xf32> to vector<8xf32>
      %92 = vector.shape_cast %91 : vector<8xf32> to vector<8x1xf32>
      %93 = vector.broadcast %92 : vector<8x1xf32> to vector<8x16xf32>
      %94 = arith.subf %90, %93 : vector<8x16xf32>
      %95 = math.exp %94 : vector<8x16xf32>
      %cst_64 = arith.constant dense<0.000000e+00> : vector<8xf32>
      %96 = vector.multi_reduction <add>, %95, %cst_64 [1] : vector<8x16xf32> to vector<8xf32>
      %97 = vector.shape_cast %96 : vector<8xf32> to vector<8x1xf32>
      %98 = vector.broadcast %97 : vector<8x1xf32> to vector<8x16xf32>
      %99 = arith.divf %95, %98 : vector<8x16xf32>
      %cst_65 = arith.constant dense<0.000000e+00> : vector<8x32xf32>
      %100 = tpu.matmul %99, %82, %cst_65 {dimension_numbers = #tpu.dot_dimension_numbers<[1], [0], [0], [1], [0, 0, 1, 1], [], []>} : vector<8x16xf32>, vector<16x32xf32>, vector<8x32xf32> -> vector<8x32xf32>
      %101 = vector.extract_strided_slice %88 {offsets = [0, 0], sizes = [8, 16], strides = [1, 1]} : vector<8x32xf32> to vector<8x16xf32>
      %102 = vector.extract_strided_slice %100 {offsets = [0, 0], sizes = [8, 16], strides = [1, 1]} : vector<8x32xf32> to vector<8x16xf32>
      %103 = tpu.concatenate %101, %102 in 1 : vector<8x16xf32>, vector<8x16xf32> -> vector<8x32xf32>
      %c0_66 = arith.constant 0 : index
      %c0_67 = arith.constant 0 : index
      %c0_68 = arith.constant 0 : index
      %c0_69 = arith.constant 0 : index
      %104 = vector.load %arg6[%c0_66, %c0_67, %c0_68, %c0_69] : memref<2x2x8x32xf32, #tpu.memory_space<vmem>>, vector<1x1x8x32xf32>
      %105 = vector.shape_cast %104 : vector<1x1x8x32xf32> to vector<8x32xf32>
      %106 = vector.shape_cast %103 : vector<8x32xf32> to vector<1x1x8x32xf32>
      tpu.vector_store %arg6[%c0_66, %c0_67, %c0_68, %c0_69], %106 {strides = array<i32>} : memref<2x2x8x32xf32, #tpu.memory_space<vmem>>, vector<1x1x8x32xf32>,
      %107 = vector.extract_strided_slice %89 {offsets = [0, 0], sizes = [8, 16], strides = [1, 1]} : vector<8x32xf32> to vector<8x16xf32>
      %108 = tpu.concatenate %107, %99 in 1 : vector<8x16xf32>, vector<8x16xf32> -> vector<8x32xf32>
      %c0_70 = arith.constant 0 : index
      %c0_71 = arith.constant 0 : index
      %c0_72 = arith.constant 0 : index
      %c0_73 = arith.constant 0 : index
      %109 = vector.load %arg7[%c0_70, %c0_71, %c0_72, %c0_73] : memref<2x2x8x32xf32, #tpu.memory_space<vmem>>, vector<1x1x8x32xf32>
      %110 = vector.shape_cast %109 : vector<1x1x8x32xf32> to vector<8x32xf32>
      %111 = vector.shape_cast %108 : vector<8x32xf32> to vector<1x1x8x32xf32>
      tpu.vector_store %arg7[%c0_70, %c0_71, %c0_72, %c0_73], %111 {strides = array<i32>} : memref<2x2x8x32xf32, #tpu.memory_space<vmem>>, vector<1x1x8x32xf32>,
      %112 = vector.extract_strided_slice %88 {offsets = [0, 16], sizes = [8, 16], strides = [1, 1]} : vector<8x32xf32> to vector<8x16xf32>
      %113 = vector.extract_strided_slice %100 {offsets = [0, 16], sizes = [8, 16], strides = [1, 1]} : vector<8x32xf32> to vector<8x16xf32>
      %114 = tpu.concatenate %112, %113 in 1 : vector<8x16xf32>, vector<8x16xf32> -> vector<8x32xf32>
      %c0_74 = arith.constant 0 : index
      %c1_75 = arith.constant 1 : index
      %c0_76 = arith.constant 0 : index
      %c0_77 = arith.constant 0 : index
      %115 = vector.load %arg6[%c0_74, %c1_75, %c0_76, %c0_77] : memref<2x2x8x32xf32, #tpu.memory_space<vmem>>, vector<1x1x8x32xf32>
      %116 = vector.shape_cast %115 : vector<1x1x8x32xf32> to vector<8x32xf32>
      %117 = vector.shape_cast %114 : vector<8x32xf32> to vector<1x1x8x32xf32>
      tpu.vector_store %arg6[%c0_74, %c1_75, %c0_76, %c0_77], %117 {strides = array<i32>} : memref<2x2x8x32xf32, #tpu.memory_space<vmem>>, vector<1x1x8x32xf32>,
      %118 = vector.extract_strided_slice %89 {offsets = [0, 16], sizes = [8, 16], strides = [1, 1]} : vector<8x32xf32> to vector<8x16xf32>
      %119 = tpu.concatenate %118, %99 in 1 : vector<8x16xf32>, vector<8x16xf32> -> vector<8x32xf32>
      %c0_78 = arith.constant 0 : index
      %c1_79 = arith.constant 1 : index
      %c0_80 = arith.constant 0 : index
      %c0_81 = arith.constant 0 : index
      %120 = vector.load %arg7[%c0_78, %c1_79, %c0_80, %c0_81] : memref<2x2x8x32xf32, #tpu.memory_space<vmem>>, vector<1x1x8x32xf32>
      %121 = vector.shape_cast %120 : vector<1x1x8x32xf32> to vector<8x32xf32>
      %122 = vector.shape_cast %119 : vector<8x32xf32> to vector<1x1x8x32xf32>
      tpu.vector_store %arg7[%c0_78, %c1_79, %c0_80, %c0_81], %122 {strides = array<i32>} : memref<2x2x8x32xf32, #tpu.memory_space<vmem>>, vector<1x1x8x32xf32>,
      %c1_82 = arith.constant 1 : index
      %c0_83 = arith.constant 0 : index
      %c0_84 = arith.constant 0 : index
      %123 = vector.load %arg2[%c1_82, %c0_83, %c0_84] : memref<2x8x32xf32, #tpu.memory_space<vmem>>, vector<1x8x32xf32>
      %124 = vector.shape_cast %123 : vector<1x8x32xf32> to vector<8x32xf32>
      %cst_85 = arith.constant dense<0.000000e+00> : vector<8x80xf32>
      %125 = tpu.matmul %124, %81, %cst_85 {dimension_numbers = #tpu.dot_dimension_numbers<[1], [0], [0], [1], [0, 0, 1, 1], [], []>} : vector<8x32xf32>, vector<32x80xf32>, vector<8x80xf32> -> vector<8x80xf32>
      %126 = vector.extract_strided_slice %125 {offsets = [0, 0], sizes = [8, 32], strides = [1, 1]} : vector<8x80xf32> to vector<8x32xf32>
      %cst_86 = arith.constant 2.500000e-01 : f32
      %127 = vector.broadcast %cst_86 : f32 to vector<8x32xf32>
      %128 = arith.mulf %126, %127 : vector<8x32xf32>
      %129 = vector.extract_strided_slice %125 {offsets = [0, 32], sizes = [8, 32], strides = [1, 1]} : vector<8x80xf32> to vector<8x32xf32>
      %130 = vector.extract_strided_slice %125 {offsets = [0, 64], sizes = [8, 16], strides = [1, 1]} : vector<8x80xf32> to vector<8x16xf32>
      %cst_87 = arith.constant dense<0xFF800000> : vector<8xf32>
      %131 = vector.multi_reduction <maximumf>, %130, %cst_87 [1] : vector<8x16xf32> to vector<8xf32>
      %132 = vector.shape_cast %131 : vector<8xf32> to vector<8x1xf32>
      %133 = vector.broadcast %132 : vector<8x1xf32> to vector<8x16xf32>
      %134 = arith.subf %130, %133 : vector<8x16xf32>
      %135 = math.exp %134 : vector<8x16xf32>
      %cst_88 = arith.constant dense<0.000000e+00> : vector<8xf32>
      %136 = vector.multi_reduction <add>, %135, %cst_88 [1] : vector<8x16xf32> to vector<8xf32>
      %137 = vector.shape_cast %136 : vector<8xf32> to vector<8x1xf32>
      %138 = vector.broadcast %137 : vector<8x1xf32> to vector<8x16xf32>
      %139 = arith.divf %135, %138 : vector<8x16xf32>
      %cst_89 = arith.constant dense<0.000000e+00> : vector<8x32xf32>
      %140 = tpu.matmul %139, %82, %cst_89 {dimension_numbers = #tpu.dot_dimension_numbers<[1], [0], [0], [1], [0, 0, 1, 1], [], []>} : vector<8x16xf32>, vector<16x32xf32>, vector<8x32xf32> -> vector<8x32xf32>
      %141 = vector.extract_strided_slice %128 {offsets = [0, 0], sizes = [8, 16], strides = [1, 1]} : vector<8x32xf32> to vector<8x16xf32>
      %142 = vector.extract_strided_slice %140 {offsets = [0, 0], sizes = [8, 16], strides = [1, 1]} : vector<8x32xf32> to vector<8x16xf32>
      %143 = tpu.concatenate %141, %142 in 1 : vector<8x16xf32>, vector<8x16xf32> -> vector<8x32xf32>
      %c1_90 = arith.constant 1 : index
      %c0_91 = arith.constant 0 : index
      %c0_92 = arith.constant 0 : index
      %c0_93 = arith.constant 0 : index
      %144 = vector.load %arg6[%c1_90, %c0_91, %c0_92, %c0_93] : memref<2x2x8x32xf32, #tpu.memory_space<vmem>>, vector<1x1x8x32xf32>
      %145 = vector.shape_cast %144 : vector<1x1x8x32xf32> to vector<8x32xf32>
      %146 = vector.shape_cast %143 : vector<8x32xf32> to vector<1x1x8x32xf32>
      tpu.vector_store %arg6[%c1_90, %c0_91, %c0_92, %c0_93], %146 {strides = array<i32>} : memref<2x2x8x32xf32, #tpu.memory_space<vmem>>, vector<1x1x8x32xf32>,
      %147 = vector.extract_strided_slice %129 {offsets = [0, 0], sizes = [8, 16], strides = [1, 1]} : vector<8x32xf32> to vector<8x16xf32>
      %148 = tpu.concatenate %147, %139 in 1 : vector<8x16xf32>, vector<8x16xf32> -> vector<8x32xf32>
      %c1_94 = arith.constant 1 : index
      %c0_95 = arith.constant 0 : index
      %c0_96 = arith.constant 0 : index
      %c0_97 = arith.constant 0 : index
      %149 = vector.load %arg7[%c1_94, %c0_95, %c0_96, %c0_97] : memref<2x2x8x32xf32, #tpu.memory_space<vmem>>, vector<1x1x8x32xf32>
      %150 = vector.shape_cast %149 : vector<1x1x8x32xf32> to vector<8x32xf32>
      %151 = vector.shape_cast %148 : vector<8x32xf32> to vector<1x1x8x32xf32>
      tpu.vector_store %arg7[%c1_94, %c0_95, %c0_96, %c0_97], %151 {strides = array<i32>} : memref<2x2x8x32xf32, #tpu.memory_space<vmem>>, vector<1x1x8x32xf32>,
      %152 = vector.extract_strided_slice %128 {offsets = [0, 16], sizes = [8, 16], strides = [1, 1]} : vector<8x32xf32> to vector<8x16xf32>
      %153 = vector.extract_strided_slice %140 {offsets = [0, 16], sizes = [8, 16], strides = [1, 1]} : vector<8x32xf32> to vector<8x16xf32>
      %154 = tpu.concatenate %152, %153 in 1 : vector<8x16xf32>, vector<8x16xf32> -> vector<8x32xf32>
      %c1_98 = arith.constant 1 : index
      %c1_99 = arith.constant 1 : index
      %c0_100 = arith.constant 0 : index
      %c0_101 = arith.constant 0 : index
      %155 = vector.load %arg6[%c1_98, %c1_99, %c0_100, %c0_101] : memref<2x2x8x32xf32, #tpu.memory_space<vmem>>, vector<1x1x8x32xf32>
      %156 = vector.shape_cast %155 : vector<1x1x8x32xf32> to vector<8x32xf32>
      %157 = vector.shape_cast %154 : vector<8x32xf32> to vector<1x1x8x32xf32>
      tpu.vector_store %arg6[%c1_98, %c1_99, %c0_100, %c0_101], %157 {strides = array<i32>} : memref<2x2x8x32xf32, #tpu.memory_space<vmem>>, vector<1x1x8x32xf32>,
      %158 = vector.extract_strided_slice %129 {offsets = [0, 16], sizes = [8, 16], strides = [1, 1]} : vector<8x32xf32> to vector<8x16xf32>
      %159 = tpu.concatenate %158, %139 in 1 : vector<8x16xf32>, vector<8x16xf32> -> vector<8x32xf32>
      %c1_102 = arith.constant 1 : index
      %c1_103 = arith.constant 1 : index
      %c0_104 = arith.constant 0 : index
      %c0_105 = arith.constant 0 : index
      %160 = vector.load %arg7[%c1_102, %c1_103, %c0_104, %c0_105] : memref<2x2x8x32xf32, #tpu.memory_space<vmem>>, vector<1x1x8x32xf32>
      %161 = vector.shape_cast %160 : vector<1x1x8x32xf32> to vector<8x32xf32>
      %162 = vector.shape_cast %159 : vector<8x32xf32> to vector<1x1x8x32xf32>
      tpu.vector_store %arg7[%c1_102, %c1_103, %c0_104, %c0_105], %162 {strides = array<i32>} : memref<2x2x8x32xf32, #tpu.memory_space<vmem>>, vector<1x1x8x32xf32>,
    } else {
    }
    %c8_i32 = arith.constant 8 : i32
    %3 = arith.muli %arg1, %c8_i32 : i32
    %4 = tpu.assume_multiple %3, 8 : i32
    %c0 = arith.constant 0 : index
    %c0_1 = arith.constant 0 : index
    %5 = arith.index_cast %4 : i32 to index
    %c0_2 = arith.constant 0 : index
    %6 = vector.load %arg6[%c0, %c0_1, %5, %c0_2] : memref<2x2x8x32xf32, #tpu.memory_space<vmem>>, vector<1x1x8x32xf32>
    %7 = vector.shape_cast %6 : vector<1x1x8x32xf32> to vector<8x32xf32>
    %c0_3 = arith.constant 0 : index
    %c0_4 = arith.constant 0 : index
    %c0_5 = arith.constant 0 : index
    %c0_6 = arith.constant 0 : index
    %8 = vector.load %arg7[%c0_3, %c0_4, %c0_5, %c0_6] : memref<2x2x8x32xf32, #tpu.memory_space<vmem>>, vector<1x1x8x32xf32>
    %9 = vector.shape_cast %8 : vector<1x1x8x32xf32> to vector<8x32xf32>
    %cst = arith.constant dense<0.000000e+00> : vector<8x8xf32>
    %10 = tpu.matmul %7, %9, %cst {dimension_numbers = #tpu.dot_dimension_numbers<[1], [1], [0], [0], [0, 0, 1, 0], [], []>} : vector<8x32xf32>, vector<8x32xf32>, vector<8x8xf32> -> vector<8x8xf32>
    %cst_7 = arith.constant dense<0xFF800000> : vector<8xf32>
    %11 = vector.multi_reduction <maximumf>, %10, %cst_7 [1] : vector<8x8xf32> to vector<8xf32>
    %12 = vector.shape_cast %11 : vector<8xf32> to vector<8x1xf32>
    %13 = vector.broadcast %12 : vector<8x1xf32> to vector<8x8xf32>
    %14 = arith.subf %10, %13 : vector<8x8xf32>
    %15 = math.exp %14 : vector<8x8xf32>
    %cst_8 = arith.constant dense<0.000000e+00> : vector<8xf32>
    %16 = vector.multi_reduction <add>, %15, %cst_8 [1] : vector<8x8xf32> to vector<8xf32>
    %17 = vector.shape_cast %16 : vector<8xf32> to vector<8x1xf32>
    %18 = tpu.reciprocal %17 {approx = true} : vector<8x1xf32> -> vector<8x1xf32>
    %19 = vector.broadcast %18 : vector<8x1xf32> to vector<8x8xf32>
    %20 = arith.mulf %15, %19 : vector<8x8xf32>
    %c0_9 = arith.constant 0 : index
    %c0_10 = arith.constant 0 : index
    %c0_11 = arith.constant 0 : index
    %c0_12 = arith.constant 0 : index
    %21 = vector.load %arg5[%c0_9, %c0_10, %c0_11, %c0_12] : memref<2x2x8x8xf32, #tpu.memory_space<vmem>>, vector<1x1x8x8xf32>
    %22 = vector.shape_cast %21 : vector<1x1x8x8xf32> to vector<8x8xf32>
    %23 = vector.shape_cast %20 : vector<8x8xf32> to vector<1x1x8x8xf32>
    tpu.vector_store %arg5[%c0_9, %c0_10, %c0_11, %c0_12], %23 {strides = array<i32>} : memref<2x2x8x8xf32, #tpu.memory_space<vmem>>, vector<1x1x8x8xf32>,
    %c0_13 = arith.constant 0 : index
    %c1 = arith.constant 1 : index
    %24 = arith.index_cast %4 : i32 to index
    %c0_14 = arith.constant 0 : index
    %25 = vector.load %arg6[%c0_13, %c1, %24, %c0_14] : memref<2x2x8x32xf32, #tpu.memory_space<vmem>>, vector<1x1x8x32xf32>
    %26 = vector.shape_cast %25 : vector<1x1x8x32xf32> to vector<8x32xf32>
    %c0_15 = arith.constant 0 : index
    %c1_16 = arith.constant 1 : index
    %c0_17 = arith.constant 0 : index
    %c0_18 = arith.constant 0 : index
    %27 = vector.load %arg7[%c0_15, %c1_16, %c0_17, %c0_18] : memref<2x2x8x32xf32, #tpu.memory_space<vmem>>, vector<1x1x8x32xf32>
    %28 = vector.shape_cast %27 : vector<1x1x8x32xf32> to vector<8x32xf32>
    %cst_19 = arith.constant dense<0.000000e+00> : vector<8x8xf32>
    %29 = tpu.matmul %26, %28, %cst_19 {dimension_numbers = #tpu.dot_dimension_numbers<[1], [1], [0], [0], [0, 0, 1, 0], [], []>} : vector<8x32xf32>, vector<8x32xf32>, vector<8x8xf32> -> vector<8x8xf32>
    %cst_20 = arith.constant dense<0xFF800000> : vector<8xf32>
    %30 = vector.multi_reduction <maximumf>, %29, %cst_20 [1] : vector<8x8xf32> to vector<8xf32>
    %31 = vector.shape_cast %30 : vector<8xf32> to vector<8x1xf32>
    %32 = vector.broadcast %31 : vector<8x1xf32> to vector<8x8xf32>
    %33 = arith.subf %29, %32 : vector<8x8xf32>
    %34 = math.exp %33 : vector<8x8xf32>
    %cst_21 = arith.constant dense<0.000000e+00> : vector<8xf32>
    %35 = vector.multi_reduction <add>, %34, %cst_21 [1] : vector<8x8xf32> to vector<8xf32>
    %36 = vector.shape_cast %35 : vector<8xf32> to vector<8x1xf32>
    %37 = tpu.reciprocal %36 {approx = true} : vector<8x1xf32> -> vector<8x1xf32>
    %38 = vector.broadcast %37 : vector<8x1xf32> to vector<8x8xf32>
    %39 = arith.mulf %34, %38 : vector<8x8xf32>
    %c0_22 = arith.constant 0 : index
    %c1_23 = arith.constant 1 : index
    %c0_24 = arith.constant 0 : index
    %c0_25 = arith.constant 0 : index
    %40 = vector.load %arg5[%c0_22, %c1_23, %c0_24, %c0_25] : memref<2x2x8x8xf32, #tpu.memory_space<vmem>>, vector<1x1x8x8xf32>
    %41 = vector.shape_cast %40 : vector<1x1x8x8xf32> to vector<8x8xf32>
    %42 = vector.shape_cast %39 : vector<8x8xf32> to vector<1x1x8x8xf32>
    tpu.vector_store %arg5[%c0_22, %c1_23, %c0_24, %c0_25], %42 {strides = array<i32>} : memref<2x2x8x8xf32, #tpu.memory_space<vmem>>, vector<1x1x8x8xf32>,
    %c1_26 = arith.constant 1 : index
    %c0_27 = arith.constant 0 : index
    %43 = arith.index_cast %4 : i32 to index
    %c0_28 = arith.constant 0 : index
    %44 = vector.load %arg6[%c1_26, %c0_27, %43, %c0_28] : memref<2x2x8x32xf32, #tpu.memory_space<vmem>>, vector<1x1x8x32xf32>
    %45 = vector.shape_cast %44 : vector<1x1x8x32xf32> to vector<8x32xf32>
    %c1_29 = arith.constant 1 : index
    %c0_30 = arith.constant 0 : index
    %c0_31 = arith.constant 0 : index
    %c0_32 = arith.constant 0 : index
    %46 = vector.load %arg7[%c1_29, %c0_30, %c0_31, %c0_32] : memref<2x2x8x32xf32, #tpu.memory_space<vmem>>, vector<1x1x8x32xf32>
    %47 = vector.shape_cast %46 : vector<1x1x8x32xf32> to vector<8x32xf32>
    %cst_33 = arith.constant dense<0.000000e+00> : vector<8x8xf32>
    %48 = tpu.matmul %45, %47, %cst_33 {dimension_numbers = #tpu.dot_dimension_numbers<[1], [1], [0], [0], [0, 0, 1, 0], [], []>} : vector<8x32xf32>, vector<8x32xf32>, vector<8x8xf32> -> vector<8x8xf32>
    %cst_34 = arith.constant dense<0xFF800000> : vector<8xf32>
    %49 = vector.multi_reduction <maximumf>, %48, %cst_34 [1] : vector<8x8xf32> to vector<8xf32>
    %50 = vector.shape_cast %49 : vector<8xf32> to vector<8x1xf32>
    %51 = vector.broadcast %50 : vector<8x1xf32> to vector<8x8xf32>
    %52 = arith.subf %48, %51 : vector<8x8xf32>
    %53 = math.exp %52 : vector<8x8xf32>
    %cst_35 = arith.constant dense<0.000000e+00> : vector<8xf32>
    %54 = vector.multi_reduction <add>, %53, %cst_35 [1] : vector<8x8xf32> to vector<8xf32>
    %55 = vector.shape_cast %54 : vector<8xf32> to vector<8x1xf32>
    %56 = tpu.reciprocal %55 {approx = true} : vector<8x1xf32> -> vector<8x1xf32>
    %57 = vector.broadcast %56 : vector<8x1xf32> to vector<8x8xf32>
    %58 = arith.mulf %53, %57 : vector<8x8xf32>
    %c1_36 = arith.constant 1 : index
    %c0_37 = arith.constant 0 : index
    %c0_38 = arith.constant 0 : index
    %c0_39 = arith.constant 0 : index
    %59 = vector.load %arg5[%c1_36, %c0_37, %c0_38, %c0_39] : memref<2x2x8x8xf32, #tpu.memory_space<vmem>>, vector<1x1x8x8xf32>
    %60 = vector.shape_cast %59 : vector<1x1x8x8xf32> to vector<8x8xf32>
    %61 = vector.shape_cast %58 : vector<8x8xf32> to vector<1x1x8x8xf32>
    tpu.vector_store %arg5[%c1_36, %c0_37, %c0_38, %c0_39], %61 {strides = array<i32>} : memref<2x2x8x8xf32, #tpu.memory_space<vmem>>, vector<1x1x8x8xf32>,
    %c1_40 = arith.constant 1 : index
    %c1_41 = arith.constant 1 : index
    %62 = arith.index_cast %4 : i32 to index
    %c0_42 = arith.constant 0 : index
    %63 = vector.load %arg6[%c1_40, %c1_41, %62, %c0_42] : memref<2x2x8x32xf32, #tpu.memory_space<vmem>>, vector<1x1x8x32xf32>
    %64 = vector.shape_cast %63 : vector<1x1x8x32xf32> to vector<8x32xf32>
    %c1_43 = arith.constant 1 : index
    %c1_44 = arith.constant 1 : index
    %c0_45 = arith.constant 0 : index
    %c0_46 = arith.constant 0 : index
    %65 = vector.load %arg7[%c1_43, %c1_44, %c0_45, %c0_46] : memref<2x2x8x32xf32, #tpu.memory_space<vmem>>, vector<1x1x8x32xf32>
    %66 = vector.shape_cast %65 : vector<1x1x8x32xf32> to vector<8x32xf32>
    %cst_47 = arith.constant dense<0.000000e+00> : vector<8x8xf32>
    %67 = tpu.matmul %64, %66, %cst_47 {dimension_numbers = #tpu.dot_dimension_numbers<[1], [1], [0], [0], [0, 0, 1, 0], [], []>} : vector<8x32xf32>, vector<8x32xf32>, vector<8x8xf32> -> vector<8x8xf32>
    %cst_48 = arith.constant dense<0xFF800000> : vector<8xf32>
    %68 = vector.multi_reduction <maximumf>, %67, %cst_48 [1] : vector<8x8xf32> to vector<8xf32>
    %69 = vector.shape_cast %68 : vector<8xf32> to vector<8x1xf32>
    %70 = vector.broadcast %69 : vector<8x1xf32> to vector<8x8xf32>
    %71 = arith.subf %67, %70 : vector<8x8xf32>
    %72 = math.exp %71 : vector<8x8xf32>
    %cst_49 = arith.constant dense<0.000000e+00> : vector<8xf32>
    %73 = vector.multi_reduction <add>, %72, %cst_49 [1] : vector<8x8xf32> to vector<8xf32>
    %74 = vector.shape_cast %73 : vector<8xf32> to vector<8x1xf32>
    %75 = tpu.reciprocal %74 {approx = true} : vector<8x1xf32> -> vector<8x1xf32>
    %76 = vector.broadcast %75 : vector<8x1xf32> to vector<8x8xf32>
    %77 = arith.mulf %72, %76 : vector<8x8xf32>
    %c1_50 = arith.constant 1 : index
    %c1_51 = arith.constant 1 : index
    %c0_52 = arith.constant 0 : index
    %c0_53 = arith.constant 0 : index
    %78 = vector.load %arg5[%c1_50, %c1_51, %c0_52, %c0_53] : memref<2x2x8x8xf32, #tpu.memory_space<vmem>>, vector<1x1x8x8xf32>
    %79 = vector.shape_cast %78 : vector<1x1x8x8xf32> to vector<8x8xf32>
    %80 = vector.shape_cast %77 : vector<8x8xf32> to vector<1x1x8x8xf32>
    tpu.vector_store %arg5[%c1_50, %c1_51, %c0_52, %c0_53], %80 {strides = array<i32>} : memref<2x2x8x8xf32, #tpu.memory_space<vmem>>, vector<1x1x8x8xf32>,
    return
  }
  func.func @transform_0(%arg0: i32, %arg1: i32) -> (i32, i32, i32) {
    %c0_i32 = arith.constant 0 : i32
    %c0_i32_0 = arith.constant 0 : i32
    %c0_i32_1 = arith.constant 0 : i32
    return %arg0, %c0_i32, %c0_i32_0 : i32, i32, i32
  }
  func.func @transform_1(%arg0: i32, %arg1: i32) -> (i32, i32) {
    %c0_i32 = arith.constant 0 : i32
    %c0_i32_0 = arith.constant 0 : i32
    %c0_i32_1 = arith.constant 0 : i32
    return %c0_i32, %c0_i32_0 : i32, i32
  }
  func.func @transform_2(%arg0: i32, %arg1: i32) -> (i32, i32) {
    %c0_i32 = arith.constant 0 : i32
    %c0_i32_0 = arith.constant 0 : i32
    %c0_i32_1 = arith.constant 0 : i32
    return %c0_i32, %c0_i32_0 : i32, i32
  }
  func.func @transform_3(%arg0: i32, %arg1: i32) -> (i32, i32, i32, i32) {
    %c0_i32 = arith.constant 0 : i32
    %c0_i32_0 = arith.constant 0 : i32
    %c0_i32_1 = arith.constant 0 : i32
    return %arg0, %c0_i32, %arg1, %c0_i32_0 : i32, i32, i32, i32
  }
}

</mosaic_0001>

<llo_original>
// kernel: relation_graph_forward.1
$region0: #{relation_graph_forward.1}
  #allocation0 [shape = 'u32[]', space=smem, size = 0x4, offset = 0x4, fixed_abs, tag = 'smem constant byte address 0x4 - core index']
  #allocation1 [shape = 'u32[144,128]{1,0:T(1,128)}', space=vmem, size = 0x12000, scoped, tag = 'internal scratch']
  #allocation2 [shape = 'f32[2,2,8,32]{3,2,1,0:T(8,128)}', space=vmem, size = 0x4000, scoped, tag = 'scratch operand']
  #allocation3 [shape = 'f32[2,2,8,32]{3,2,1,0:T(8,128)}', space=vmem, size = 0x4000, scoped, tag = 'scratch operand']
  %s0 = inlined_call_operand.vmem [shape: f32[2,8,32], index: 0, kind: input, shape index: {}]
  %s1 = inlined_call_operand.vmem [shape: f32[32,80], index: 1, kind: input, shape index: {}]
  %s2 = inlined_call_operand.vmem [shape: f32[16,32], index: 2, kind: input, shape index: {}]
  %s3 = inlined_call_operand.hbm [shape: f32[2,2,8,8], index: 3, kind: output, shape index: {}]
  %s4 = sld [smem:[#allocation0]]
  $region26: #{relation_graph_forward.1} parent=0
    _
  %s6 = ssub.s32 1, %s4
  %s7 = scalar_select 0, %s6, %s4
  $region1: #{relation_graph_forward.1} parent=0
    #allocation4 [shape = 'u8[16384]{0}', space=vmem, size = 0x4000, scoped, tag = 'output window, operand 0, single buffered']
    #allocation5 [shape = 's32[1]{0}', space=sflag, size = 0x4, scoped, tag = 'scoped memory for relation_graph_forward.1']
    %8 = vsyncpa [#allocation5], 0
    // Predicated region
    $region2: #{relation_graph_forward.1} parent=1 // pred_check
      _
    $region3: #{relation_graph_forward.1} parent=1 // pred_check_branch
      %10 = sbr.rel (0) target = $region5
    $region4: #{relation_graph_forward.1} parent=1 // pred_region
      _
    $region5: #{relation_graph_forward.1} parent=1 // pred_fallthru
      _
    // Predicated region
    $region6: #{relation_graph_forward.1} parent=1 // pred_check
      _
    $region7: #{relation_graph_forward.1} parent=1 // pred_check_branch
      %12 = sbr.rel (0) target = $region9
    $region8: #{relation_graph_forward.1} parent=1 // pred_region
      _
    $region9: #{relation_graph_forward.1} parent=1 // pred_fallthru
      _
    // Predicated region
    $region10: #{relation_graph_forward.1} parent=1 // pred_check
      _
    $region11: #{relation_graph_forward.1} parent=1 // pred_check_branch
      %14 = sbr.rel (0) target = $region13
    $region12: #{relation_graph_forward.1} parent=1 // pred_region
      _
    $region13: #{relation_graph_forward.1} parent=1 // pred_fallthru
      _
    %p15 = scmp.eq.s32.totalorder 0, 0
    // Predicated region
    $region14: #{relation_graph_forward.1} parent=1 // pred_check
      %p16 = pneg %p15
    $region15: #{relation_graph_forward.1} parent=1 // pred_check_branch
      %18 = sbr.rel (%p16) target = $region17
    $region16: #{relation_graph_forward.1} parent=1 // pred_region
      %v19 = vld [vmem:[%s1] sm:$0xff]
      %v20 = vld [vmem:[%s1 + $0x8] sm:$0xff]
      %v21 = vld [vmem:[%s1 + $0x10] sm:$0xff]
      %v22 = vld [vmem:[%s1 + $0x18] sm:$0xff]
      %v23 = vld [vmem:[%s2] sm:$0xff]
      %v24 = vld [vmem:[%s2 + $0x8] sm:$0xff]
      %v25 = vld [vmem:[%s0] sm:$0xff]
      %vm26 = vcmask 261120
      %v28 = vsel %vm26, %v25, 0
      %30 = vmatprep.subr.mxu0 0.0
      %31 = vmatpush1.msra.mxu0 %v19
      %32 = vmatprep.subr.mxu0 0.0
      %33 = vmatpush1.msra.mxu0 %v20
      %34 = vmatprep.subr.mxu0 0.0
      %35 = vmatpush1.msra.mxu0 %v21
      %36 = vmatprep.subr.mxu0 0.0
      %37 = vmatpush1.msra.mxu0 %v22
      %38 = vmatprep.subr.mxu0 0.0
      %39 = vmatpush1.msra.mxu0 0.0
      %40 = vmatprep.subr.mxu0 0.0
      %41 = vmatpush1.msra.mxu0 0.0
      %42 = vmatprep.subr.mxu0 0.0
      %43 = vmatpush1.msra.mxu0 0.0
      %44 = vmatprep.subr.mxu0 0.0
      %45 = vmatpush1.msra.mxu0 0.0
      %46 = vmatprep.subr.mxu0 0.0
      %47 = vmatpush1.msra.mxu0 0.0
      %48 = vmatprep.subr.mxu0 0.0
      %49 = vmatpush1.msra.mxu0 0.0
      %50 = vmatprep.subr.mxu0 0.0
      %51 = vmatpush1.msra.mxu0 0.0
      %52 = vmatprep.subr.mxu0 0.0
      %53 = vmatpush1.msra.mxu0 0.0
      %54 = vmatprep.subr.mxu0 0.0
      %55 = vmatpush1.msra.mxu0 0.0
      %56 = vmatprep.subr.mxu0 0.0
      %57 = vmatpush1.msra.mxu0 0.0
      %58 = vmatprep.subr.mxu0 0.0
      %59 = vmatpush1.msra.mxu0 0.0
      %60 = vmatprep.subr.mxu0 0.0
      %61 = vmatpush1.msra.mxu0 0.0
      %62 = vmatprep.subr.mxu0 0.0
      %63 = vmatpush1.msra.mxu0 0.0
      %64 = vmatprep.subr.mxu0 0.0
      %65 = vmatpush1.msra.mxu0 0.0
      %66 = vmatprep.subr.mxu0 0.0
      %67 = vmatpush1.msra.mxu0 0.0
      %68 = vmatprep.subr.mxu0 0.0
      %69 = vmatpush1.msra.mxu0 0.0
      %70 = vmatprep.subr.mxu0 0.0
      %71 = vmatpush1.msra.mxu0 0.0
      %72 = vmatprep.subr.mxu0 0.0
      %73 = vmatpush1.msra.mxu0 0.0
      %74 = vmatprep.subr.mxu0 0.0
      %75 = vmatpush1.msra.mxu0 0.0
      %76 = vmatprep.subr.mxu0 0.0
      %77 = vmatpush1.msra.mxu0 0.0
      %78 = vmatprep.subr.mxu0 0.0
      %79 = vmatpush1.msra.mxu0 0.0
      %80 = vmatprep.subr.mxu0 0.0
      %81 = vmatpush1.msra.mxu0 0.0
      %82 = vmatprep.subr.mxu0 0.0
      %83 = vmatpush1.msra.mxu0 0.0
      %84 = vmatprep.subr.mxu0 0.0
      %85 = vmatpush1.msra.mxu0 0.0
      %86 = vmatprep.subr.mxu0 0.0
      %87 = vmatpush1.msra.mxu0 0.0
      %88 = vmatprep.subr.mxu0 0.0
      %89 = vmatpush1.msra.mxu0 0.0
      %90 = vmatprep.subr.mxu0 0.0
      %91 = vmatpush1.msra.mxu0 0.0
      %92 = vmatprep.subr.mxu0 0.0
      %93 = vmatpush1.msra.mxu0 0.0
      %94 = vmatprep.mubr.f32.mxu0 0.0
      %95 = vmatmul.mubr.f32.gmra.mrb[0].mxu0 %v28
      %v96 = vpop.f32.mrb[0].mxu0
      %v97 = vadd.f32 0.0, %v96
      %v98 = vpop.f32.mrb[0].mxu0
      %99 = vdwg.mxu0
      %v100 = vmul.f32 %v97, 0.25
      %vm101 = vcmask 654848
      %v102 = vsel %vm101, %v97, -inf
      %103 = vmax.xlane.f32.xlu0 %v102
      %v104 = vpop.xlane.xlu0 %103
      %v105 = vsub.f32 %v97, %v104
      %v106 = vmul.f32 %v105, 1.442695
      %v107 = vpow.pop %v106
      %109 = vrot.lane.b32.xlu0 %v107, 64
      %v110 = vpop.permute.xlu0 %109
      %vm112 = vcmask 130048
      %v113 = vsel %vm112, %v110, 0.0
      %114 = vadd.xlane.f32.xlu0 %v113
      %v115 = vpop.xlane.xlu0 %114
      %v116 = vrcp.pop %v115
      %v117 = vmul.f32 %v107, %v116
      %119 = vrot.lane.b32.xlu0 %v117, 64
      %v120 = vpop.permute.xlu0 %119
      %v121 = vsel %vm112, %v120, 0
      %123 = vmatprep.subr.mxu0 0.0
      %124 = vmatpush1.msra.mxu0 %v23
      %125 = vmatprep.subr.mxu0 0.0
      %126 = vmatpush1.msra.mxu0 %v24
      %127 = vmatprep.subr.mxu0 0.0
      %128 = vmatpush1.msra.mxu0 0.0
      %129 = vmatprep.subr.mxu0 0.0
      %130 = vmatpush1.msra.mxu0 0.0
      %131 = vmatprep.subr.mxu0 0.0
      %132 = vmatpush1.msra.mxu0 0.0
      %133 = vmatprep.subr.mxu0 0.0
      %134 = vmatpush1.msra.mxu0 0.0
      %135 = vmatprep.subr.mxu0 0.0
      %136 = vmatpush1.msra.mxu0 0.0
      %137 = vmatprep.subr.mxu0 0.0
      %138 = vmatpush1.msra.mxu0 0.0
      %139 = vmatprep.subr.mxu0 0.0
      %140 = vmatpush1.msra.mxu0 0.0
      %141 = vmatprep.subr.mxu0 0.0
      %142 = vmatpush1.msra.mxu0 0.0
      %143 = vmatprep.subr.mxu0 0.0
      %144 = vmatpush1.msra.mxu0 0.0
      %145 = vmatprep.subr.mxu0 0.0
      %146 = vmatpush1.msra.mxu0 0.0
      %147 = vmatprep.subr.mxu0 0.0
      %148 = vmatpush1.msra.mxu0 0.0
      %149 = vmatprep.subr.mxu0 0.0
      %150 = vmatpush1.msra.mxu0 0.0
      %151 = vmatprep.subr.mxu0 0.0
      %152 = vmatpush1.msra.mxu0 0.0
      %153 = vmatprep.subr.mxu0 0.0
      %154 = vmatpush1.msra.mxu0 0.0
      %155 = vmatprep.subr.mxu0 0.0
      %156 = vmatpush1.msra.mxu0 0.0
      %157 = vmatprep.subr.mxu0 0.0
      %158 = vmatpush1.msra.mxu0 0.0
      %159 = vmatprep.subr.mxu0 0.0
      %160 = vmatpush1.msra.mxu0 0.0
      %161 = vmatprep.subr.mxu0 0.0
      %162 = vmatpush1.msra.mxu0 0.0
      %163 = vmatprep.subr.mxu0 0.0
      %164 = vmatpush1.msra.mxu0 0.0
      %165 = vmatprep.subr.mxu0 0.0
      %166 = vmatpush1.msra.mxu0 0.0
      %167 = vmatprep.subr.mxu0 0.0
      %168 = vmatpush1.msra.mxu0 0.0
      %169 = vmatprep.subr.mxu0 0.0
      %170 = vmatpush1.msra.mxu0 0.0
      %171 = vmatprep.subr.mxu0 0.0
      %172 = vmatpush1.msra.mxu0 0.0
      %173 = vmatprep.subr.mxu0 0.0
      %174 = vmatpush1.msra.mxu0 0.0
      %175 = vmatprep.subr.mxu0 0.0
      %176 = vmatpush1.msra.mxu0 0.0
      %177 = vmatprep.subr.mxu0 0.0
      %178 = vmatpush1.msra.mxu0 0.0
      %179 = vmatprep.subr.mxu0 0.0
      %180 = vmatpush1.msra.mxu0 0.0
      %181 = vmatprep.subr.mxu0 0.0
      %182 = vmatpush1.msra.mxu0 0.0
      %183 = vmatprep.subr.mxu0 0.0
      %184 = vmatpush1.msra.mxu0 0.0
      %185 = vmatprep.subr.mxu0 0.0
      %186 = vmatpush1.msra.mxu0 0.0
      %187 = vmatprep.mubr.f32.mxu0 0.0
      %188 = vmatmul.mubr.f32.gmra.mrb[0].mxu0 %v121
      %v189 = vpop.f32.mrb[0].mxu0
      %v190 = vadd.f32 0.0, %v189
      %v191 = vpop.f32.mrb[0].mxu0
      %192 = vdwg.mxu0
      %194 = vrot.lane.b32.xlu0 %v190, 16
      %v195 = vpop.permute.xlu0 %194
      %v197 = vsel %vm112, %v100, %v195
      %198 = vst.msk [vmem:[#allocation2] sm:$0xff] %vm26, %v197
      %200 = vrot.lane.b32.xlu0 %v97, 96
      %v201 = vpop.permute.xlu0 %200
      %203 = vrot.lane.b32.xlu0 %v117, 80
      %v204 = vpop.permute.xlu0 %203
      %v206 = vsel %vm112, %v201, %v204
      %207 = vst.msk [vmem:[#allocation3] sm:$0xff] %vm26, %v206
      %209 = vrot.lane.b32.xlu0 %v100, 112
      %v210 = vpop.permute.xlu0 %209
      %v212 = vsel %vm112, %v210, %v190
      %s213 = scalar_lea.vmem [#allocation2], 8
      %214 = vst.msk [vmem:[%s213] sm:$0xff] %vm26, %v212
      %215 = vrot.lane.b32.xlu0 %v97, 80
      %v216 = vpop.permute.xlu0 %215
      %v218 = vsel %vm112, %v216, %v204
      %s219 = scalar_lea.vmem [#allocation3], 8
      %220 = vst.msk [vmem:[%s219] sm:$0xff] %vm26, %v218
      %s221 = scalar_lea.vmem %s0, 8
      %v222 = vld [vmem:[%s221] sm:$0xff]
      %v224 = vsel %vm26, %v222, 0
      %226 = vmatprep.subr.mxu0 0.0
      %227 = vmatpush1.msra.mxu0 %v19
      %228 = vmatprep.subr.mxu0 0.0
      %229 = vmatpush1.msra.mxu0 %v20
      %230 = vmatprep.subr.mxu0 0.0
      %231 = vmatpush1.msra.mxu0 %v21
      %232 = vmatprep.subr.mxu0 0.0
      %233 = vmatpush1.msra.mxu0 %v22
      %234 = vmatprep.subr.mxu0 0.0
      %235 = vmatpush1.msra.mxu0 0.0
      %236 = vmatprep.subr.mxu0 0.0
      %237 = vmatpush1.msra.mxu0 0.0
      %238 = vmatprep.subr.mxu0 0.0
      %239 = vmatpush1.msra.mxu0 0.0
      %240 = vmatprep.subr.mxu0 0.0
      %241 = vmatpush1.msra.mxu0 0.0
      %242 = vmatprep.subr.mxu0 0.0
      %243 = vmatpush1.msra.mxu0 0.0
      %244 = vmatprep.subr.mxu0 0.0
      %245 = vmatpush1.msra.mxu0 0.0
      %246 = vmatprep.subr.mxu0 0.0
      %247 = vmatpush1.msra.mxu0 0.0
      %248 = vmatprep.subr.mxu0 0.0
      %249 = vmatpush1.msra.mxu0 0.0
      %250 = vmatprep.subr.mxu0 0.0
      %251 = vmatpush1.msra.mxu0 0.0
      %252 = vmatprep.subr.mxu0 0.0
      %253 = vmatpush1.msra.mxu0 0.0
      %254 = vmatprep.subr.mxu0 0.0
      %255 = vmatpush1.msra.mxu0 0.0
      %256 = vmatprep.subr.mxu0 0.0
      %257 = vmatpush1.msra.mxu0 0.0
      %258 = vmatprep.subr.mxu0 0.0
      %259 = vmatpush1.msra.mxu0 0.0
      %260 = vmatprep.subr.mxu0 0.0
      %261 = vmatpush1.msra.mxu0 0.0
      %262 = vmatprep.subr.mxu0 0.0
      %263 = vmatpush1.msra.mxu0 0.0
      %264 = vmatprep.subr.mxu0 0.0
      %265 = vmatpush1.msra.mxu0 0.0
      %266 = vmatprep.subr.mxu0 0.0
      %267 = vmatpush1.msra.mxu0 0.0
      %268 = vmatprep.subr.mxu0 0.0
      %269 = vmatpush1.msra.mxu0 0.0
      %270 = vmatprep.subr.mxu0 0.0
      %271 = vmatpush1.msra.mxu0 0.0
      %272 = vmatprep.subr.mxu0 0.0
      %273 = vmatpush1.msra.mxu0 0.0
      %274 = vmatprep.subr.mxu0 0.0
      %275 = vmatpush1.msra.mxu0 0.0
      %276 = vmatprep.subr.mxu0 0.0
      %277 = vmatpush1.msra.mxu0 0.0
      %278 = vmatprep.subr.mxu0 0.0
      %279 = vmatpush1.msra.mxu0 0.0
      %280 = vmatprep.subr.mxu0 0.0
      %281 = vmatpush1.msra.mxu0 0.0
      %282 = vmatprep.subr.mxu0 0.0
      %283 = vmatpush1.msra.mxu0 0.0
      %284 = vmatprep.subr.mxu0 0.0
      %285 = vmatpush1.msra.mxu0 0.0
      %286 = vmatprep.subr.mxu0 0.0
      %287 = vmatpush1.msra.mxu0 0.0
      %288 = vmatprep.subr.mxu0 0.0
      %289 = vmatpush1.msra.mxu0 0.0
      %290 = vmatprep.mubr.f32.mxu0 0.0
      %291 = vmatmul.mubr.f32.gmra.mrb[0].mxu0 %v224
      %v292 = vpop.f32.mrb[0].mxu0
      %v293 = vadd.f32 0.0, %v292
      %v294 = vpop.f32.mrb[0].mxu0
      %295 = vdwg.mxu0
      %v296 = vmul.f32 %v293, 0.25
      %v297 = vsel %vm101, %v293, -inf
      %298 = vmax.xlane.f32.xlu0 %v297
      %v299 = vpop.xlane.xlu0 %298
      %v300 = vsub.f32 %v293, %v299
      %v301 = vmul.f32 %v300, 1.442695
      %v302 = vpow.pop %v301
      %304 = vrot.lane.b32.xlu0 %v302, 64
      %v305 = vpop.permute.xlu0 %304
      %v307 = vsel %vm112, %v305, 0.0
      %308 = vadd.xlane.f32.xlu0 %v307
      %v309 = vpop.xlane.xlu0 %308
      %v310 = vrcp.pop %v309
      %v311 = vmul.f32 %v302, %v310
      %313 = vrot.lane.b32.xlu0 %v311, 64
      %v314 = vpop.permute.xlu0 %313
      %v315 = vsel %vm112, %v314, 0
      %317 = vmatprep.subr.mxu0 0.0
      %318 = vmatpush1.msra.mxu0 %v23
      %319 = vmatprep.subr.mxu0 0.0
      %320 = vmatpush1.msra.mxu0 %v24
      %321 = vmatprep.subr.mxu0 0.0
      %322 = vmatpush1.msra.mxu0 0.0
      %323 = vmatprep.subr.mxu0 0.0
      %324 = vmatpush1.msra.mxu0 0.0
      %325 = vmatprep.subr.mxu0 0.0
      %326 = vmatpush1.msra.mxu0 0.0
      %327 = vmatprep.subr.mxu0 0.0
      %328 = vmatpush1.msra.mxu0 0.0
      %329 = vmatprep.subr.mxu0 0.0
      %330 = vmatpush1.msra.mxu0 0.0
      %331 = vmatprep.subr.mxu0 0.0
      %332 = vmatpush1.msra.mxu0 0.0
      %333 = vmatprep.subr.mxu0 0.0
      %334 = vmatpush1.msra.mxu0 0.0
      %335 = vmatprep.subr.mxu0 0.0
      %336 = vmatpush1.msra.mxu0 0.0
      %337 = vmatprep.subr.mxu0 0.0
      %338 = vmatpush1.msra.mxu0 0.0
      %339 = vmatprep.subr.mxu0 0.0
      %340 = vmatpush1.msra.mxu0 0.0
      %341 = vmatprep.subr.mxu0 0.0
      %342 = vmatpush1.msra.mxu0 0.0
      %343 = vmatprep.subr.mxu0 0.0
      %344 = vmatpush1.msra.mxu0 0.0
      %345 = vmatprep.subr.mxu0 0.0
      %346 = vmatpush1.msra.mxu0 0.0
      %347 = vmatprep.subr.mxu0 0.0
      %348 = vmatpush1.msra.mxu0 0.0
      %349 = vmatprep.subr.mxu0 0.0
      %350 = vmatpush1.msra.mxu0 0.0
      %351 = vmatprep.subr.mxu0 0.0
      %352 = vmatpush1.msra.mxu0 0.0
      %353 = vmatprep.subr.mxu0 0.0
      %354 = vmatpush1.msra.mxu0 0.0
      %355 = vmatprep.subr.mxu0 0.0
      %356 = vmatpush1.msra.mxu0 0.0
      %357 = vmatprep.subr.mxu0 0.0
      %358 = vmatpush1.msra.mxu0 0.0
      %359 = vmatprep.subr.mxu0 0.0
      %360 = vmatpush1.msra.mxu0 0.0
      %361 = vmatprep.subr.mxu0 0.0
      %362 = vmatpush1.msra.mxu0 0.0
      %363 = vmatprep.subr.mxu0 0.0
      %364 = vmatpush1.msra.mxu0 0.0
      %365 = vmatprep.subr.mxu0 0.0
      %366 = vmatpush1.msra.mxu0 0.0
      %367 = vmatprep.subr.mxu0 0.0
      %368 = vmatpush1.msra.mxu0 0.0
      %369 = vmatprep.subr.mxu0 0.0
      %370 = vmatpush1.msra.mxu0 0.0
      %371 = vmatprep.subr.mxu0 0.0
      %372 = vmatpush1.msra.mxu0 0.0
      %373 = vmatprep.subr.mxu0 0.0
      %374 = vmatpush1.msra.mxu0 0.0
      %375 = vmatprep.subr.mxu0 0.0
      %376 = vmatpush1.msra.mxu0 0.0
      %377 = vmatprep.subr.mxu0 0.0
      %378 = vmatpush1.msra.mxu0 0.0
      %379 = vmatprep.subr.mxu0 0.0
      %380 = vmatpush1.msra.mxu0 0.0
      %381 = vmatprep.mubr.f32.mxu0 0.0
      %382 = vmatmul.mubr.f32.gmra.mrb[0].mxu0 %v315
      %v383 = vpop.f32.mrb[0].mxu0
      %v384 = vadd.f32 0.0, %v383
      %v385 = vpop.f32.mrb[0].mxu0
      %386 = vdwg.mxu0
      %388 = vrot.lane.b32.xlu0 %v384, 16
      %v389 = vpop.permute.xlu0 %388
      %v391 = vsel %vm112, %v296, %v389
      %s392 = scalar_lea.vmem [#allocation2], 16
      %393 = vst.msk [vmem:[%s392] sm:$0xff] %vm26, %v391
      %395 = vrot.lane.b32.xlu0 %v293, 96
      %v396 = vpop.permute.xlu0 %395
      %398 = vrot.lane.b32.xlu0 %v311, 80
      %v399 = vpop.permute.xlu0 %398
      %v401 = vsel %vm112, %v396, %v399
      %s402 = scalar_lea.vmem [#allocation3], 16
      %403 = vst.msk [vmem:[%s402] sm:$0xff] %vm26, %v401
      %405 = vrot.lane.b32.xlu0 %v296, 112
      %v406 = vpop.permute.xlu0 %405
      %v408 = vsel %vm112, %v406, %v384
      %s409 = scalar_lea.vmem [#allocation2], 24
      %410 = vst.msk [vmem:[%s409] sm:$0xff] %vm26, %v408
      %411 = vrot.lane.b32.xlu0 %v293, 80
      %v412 = vpop.permute.xlu0 %411
      %v414 = vsel %vm112, %v412, %v399
      %s415 = scalar_lea.vmem [#allocation3], 24
      %416 = vst.msk [vmem:[%s415] sm:$0xff] %vm26, %v414
    $region17: #{relation_graph_forward.1} parent=1 // pred_fallthru
      _
    %s417 = smul.u32 0, 8
    %s418 = scalar_lea.vmem [#allocation2], %s417
    %v419 = vld [vmem:[%s418] sm:$0xff]
    %v420 = vld [vmem:[#allocation3] sm:$0xff]
    %vm421 = vcmask 261120
    %v423 = vsel %vm421, %v419, 0
    %v426 = vsel %vm421, %v420, 0
    %428 = vmatprep.subr.mxu0 0.0
    %429 = vmatpush1.xpose.msra.mxu0 %v426
    %430 = vmatprep.subr.mxu0 0.0
    %431 = vmatpush1.xpose.msra.mxu0 0.0
    %432 = vmatprep.subr.mxu0 0.0
    %433 = vmatpush1.xpose.msra.mxu0 0.0
    %434 = vmatprep.subr.mxu0 0.0
    %435 = vmatpush1.xpose.msra.mxu0 0.0
    %436 = vmatprep.subr.mxu0 0.0
    %437 = vmatpush1.xpose.msra.mxu0 0.0
    %438 = vmatprep.subr.mxu0 0.0
    %439 = vmatpush1.xpose.msra.mxu0 0.0
    %440 = vmatprep.subr.mxu0 0.0
    %441 = vmatpush1.xpose.msra.mxu0 0.0
    %442 = vmatprep.subr.mxu0 0.0
    %443 = vmatpush1.xpose.msra.mxu0 0.0
    %444 = vmatprep.subr.mxu0 0.0
    %445 = vmatpush1.xpose.msra.mxu0 0.0
    %446 = vmatprep.subr.mxu0 0.0
    %447 = vmatpush1.xpose.msra.mxu0 0.0
    %448 = vmatprep.subr.mxu0 0.0
    %449 = vmatpush1.xpose.msra.mxu0 0.0
    %450 = vmatprep.subr.mxu0 0.0
    %451 = vmatpush1.xpose.msra.mxu0 0.0
    %452 = vmatprep.subr.mxu0 0.0
    %453 = vmatpush1.xpose.msra.mxu0 0.0
    %454 = vmatprep.subr.mxu0 0.0
    %455 = vmatpush1.xpose.msra.mxu0 0.0
    %456 = vmatprep.subr.mxu0 0.0
    %457 = vmatpush1.xpose.msra.mxu0 0.0
    %458 = vmatprep.subr.mxu0 0.0
    %459 = vmatpush1.xpose.msra.mxu0 0.0
    %460 = vmatprep.subr.mxu0 0.0
    %461 = vmatpush1.xpose.msra.mxu0 0.0
    %462 = vmatprep.subr.mxu0 0.0
    %463 = vmatpush1.xpose.msra.mxu0 0.0
    %464 = vmatprep.subr.mxu0 0.0
    %465 = vmatpush1.xpose.msra.mxu0 0.0
    %466 = vmatprep.subr.mxu0 0.0
    %467 = vmatpush1.xpose.msra.mxu0 0.0
    %468 = vmatprep.subr.mxu0 0.0
    %469 = vmatpush1.xpose.msra.mxu0 0.0
    %470 = vmatprep.subr.mxu0 0.0
    %471 = vmatpush1.xpose.msra.mxu0 0.0
    %472 = vmatprep.subr.mxu0 0.0
    %473 = vmatpush1.xpose.msra.mxu0 0.0
    %474 = vmatprep.subr.mxu0 0.0
    %475 = vmatpush1.xpose.msra.mxu0 0.0
    %476 = vmatprep.subr.mxu0 0.0
    %477 = vmatpush1.xpose.msra.mxu0 0.0
    %478 = vmatprep.subr.mxu0 0.0
    %479 = vmatpush1.xpose.msra.mxu0 0.0
    %480 = vmatprep.subr.mxu0 0.0
    %481 = vmatpush1.xpose.msra.mxu0 0.0
    %482 = vmatprep.subr.mxu0 0.0
    %483 = vmatpush1.xpose.msra.mxu0 0.0
    %484 = vmatprep.subr.mxu0 0.0
    %485 = vmatpush1.xpose.msra.mxu0 0.0
    %486 = vmatprep.subr.mxu0 0.0
    %487 = vmatpush1.xpose.msra.mxu0 0.0
    %488 = vmatprep.subr.mxu0 0.0
    %489 = vmatpush1.xpose.msra.mxu0 0.0
    %490 = vmatprep.subr.mxu0 0.0
    %491 = vmatpush1.xpose.msra.mxu0 0.0
    %492 = vmatprep.mubr.f32.mxu0 0.0
    %493 = vmatmul.mubr.f32.gmra.mrb[0].mxu0 %v423
    %v494 = vpop.f32.mrb[0].mxu0
    %v495 = vadd.f32 0.0, %v494
    %v496 = vpop.f32.mrb[0].mxu0
    %497 = vdwg.mxu0
    %vm498 = vcmask 64512
    %v499 = vsel %vm498, %v495, -inf
    %500 = vmax.xlane.f32.xlu0 %v499
    %v501 = vpop.xlane.xlu0 %500
    %v502 = vsub.f32 %v495, %v501
    %v503 = vmul.f32 %v502, 1.442695
    %v504 = vpow.pop %v503
    %v505 = vsel %vm498, %v504, 0.0
    %506 = vadd.xlane.f32.xlu0 %v505
    %v507 = vpop.xlane.xlu0 %506
    %v508 = vrcp.pop %v507
    %v509 = vmul.f32 %v504, %v508
    %510 = vst.msk [vmem:[#allocation4] sm:$0xff] %vm498, %v509
    %s511 = sadd.s32 %s417, 8
    %s512 = scalar_lea.vmem [#allocation2], %s511
    %v513 = vld [vmem:[%s512] sm:$0xff]
    %s514 = scalar_lea.vmem [#allocation3], 8
    %v515 = vld [vmem:[%s514] sm:$0xff]
    %v517 = vsel %vm421, %v513, 0
    %v520 = vsel %vm421, %v515, 0
    %522 = vmatprep.subr.mxu0 0.0
    %523 = vmatpush1.xpose.msra.mxu0 %v520
    %524 = vmatprep.subr.mxu0 0.0
    %525 = vmatpush1.xpose.msra.mxu0 0.0
    %526 = vmatprep.subr.mxu0 0.0
    %527 = vmatpush1.xpose.msra.mxu0 0.0
    %528 = vmatprep.subr.mxu0 0.0
    %529 = vmatpush1.xpose.msra.mxu0 0.0
    %530 = vmatprep.subr.mxu0 0.0
    %531 = vmatpush1.xpose.msra.mxu0 0.0
    %532 = vmatprep.subr.mxu0 0.0
    %533 = vmatpush1.xpose.msra.mxu0 0.0
    %534 = vmatprep.subr.mxu0 0.0
    %535 = vmatpush1.xpose.msra.mxu0 0.0
    %536 = vmatprep.subr.mxu0 0.0
    %537 = vmatpush1.xpose.msra.mxu0 0.0
    %538 = vmatprep.subr.mxu0 0.0
    %539 = vmatpush1.xpose.msra.mxu0 0.0
    %540 = vmatprep.subr.mxu0 0.0
    %541 = vmatpush1.xpose.msra.mxu0 0.0
    %542 = vmatprep.subr.mxu0 0.0
    %543 = vmatpush1.xpose.msra.mxu0 0.0
    %544 = vmatprep.subr.mxu0 0.0
    %545 = vmatpush1.xpose.msra.mxu0 0.0
    %546 = vmatprep.subr.mxu0 0.0
    %547 = vmatpush1.xpose.msra.mxu0 0.0
    %548 = vmatprep.subr.mxu0 0.0
    %549 = vmatpush1.xpose.msra.mxu0 0.0
    %550 = vmatprep.subr.mxu0 0.0
    %551 = vmatpush1.xpose.msra.mxu0 0.0
    %552 = vmatprep.subr.mxu0 0.0
    %553 = vmatpush1.xpose.msra.mxu0 0.0
    %554 = vmatprep.subr.mxu0 0.0
    %555 = vmatpush1.xpose.msra.mxu0 0.0
    %556 = vmatprep.subr.mxu0 0.0
    %557 = vmatpush1.xpose.msra.mxu0 0.0
    %558 = vmatprep.subr.mxu0 0.0
    %559 = vmatpush1.xpose.msra.mxu0 0.0
    %560 = vmatprep.subr.mxu0 0.0
    %561 = vmatpush1.xpose.msra.mxu0 0.0
    %562 = vmatprep.subr.mxu0 0.0
    %563 = vmatpush1.xpose.msra.mxu0 0.0
    %564 = vmatprep.subr.mxu0 0.0
    %565 = vmatpush1.xpose.msra.mxu0 0.0
    %566 = vmatprep.subr.mxu0 0.0
    %567 = vmatpush1.xpose.msra.mxu0 0.0
    %568 = vmatprep.subr.mxu0 0.0
    %569 = vmatpush1.xpose.msra.mxu0 0.0
    %570 = vmatprep.subr.mxu0 0.0
    %571 = vmatpush1.xpose.msra.mxu0 0.0
    %572 = vmatprep.subr.mxu0 0.0
    %573 = vmatpush1.xpose.msra.mxu0 0.0
    %574 = vmatprep.subr.mxu0 0.0
    %575 = vmatpush1.xpose.msra.mxu0 0.0
    %576 = vmatprep.subr.mxu0 0.0
    %577 = vmatpush1.xpose.msra.mxu0 0.0
    %578 = vmatprep.subr.mxu0 0.0
    %579 = vmatpush1.xpose.msra.mxu0 0.0
    %580 = vmatprep.subr.mxu0 0.0
    %581 = vmatpush1.xpose.msra.mxu0 0.0
    %582 = vmatprep.subr.mxu0 0.0
    %583 = vmatpush1.xpose.msra.mxu0 0.0
    %584 = vmatprep.subr.mxu0 0.0
    %585 = vmatpush1.xpose.msra.mxu0 0.0
    %586 = vmatprep.mubr.f32.mxu0 0.0
    %587 = vmatmul.mubr.f32.gmra.mrb[0].mxu0 %v517
    %v588 = vpop.f32.mrb[0].mxu0
    %v589 = vadd.f32 0.0, %v588
    %v590 = vpop.f32.mrb[0].mxu0
    %591 = vdwg.mxu0
    %v592 = vsel %vm498, %v589, -inf
    %593 = vmax.xlane.f32.xlu0 %v592
    %v594 = vpop.xlane.xlu0 %593
    %v595 = vsub.f32 %v589, %v594
    %v596 = vmul.f32 %v595, 1.442695
    %v597 = vpow.pop %v596
    %v598 = vsel %vm498, %v597, 0.0
    %599 = vadd.xlane.f32.xlu0 %v598
    %v600 = vpop.xlane.xlu0 %599
    %v601 = vrcp.pop %v600
    %v602 = vmul.f32 %v597, %v601
    %s603 = scalar_lea.vmem [#allocation4], 8
    %604 = vst.msk [vmem:[%s603] sm:$0xff] %vm498, %v602
    %s605 = sadd.s32 %s417, 16
    %s606 = scalar_lea.vmem [#allocation2], %s605
    %v607 = vld [vmem:[%s606] sm:$0xff]
    %s608 = scalar_lea.vmem [#allocation3], 16
    %v609 = vld [vmem:[%s608] sm:$0xff]
    %v611 = vsel %vm421, %v607, 0
    %v614 = vsel %vm421, %v609, 0
    %616 = vmatprep.subr.mxu0 0.0
    %617 = vmatpush1.xpose.msra.mxu0 %v614
    %618 = vmatprep.subr.mxu0 0.0
    %619 = vmatpush1.xpose.msra.mxu0 0.0
    %620 = vmatprep.subr.mxu0 0.0
    %621 = vmatpush1.xpose.msra.mxu0 0.0
    %622 = vmatprep.subr.mxu0 0.0
    %623 = vmatpush1.xpose.msra.mxu0 0.0
    %624 = vmatprep.subr.mxu0 0.0
    %625 = vmatpush1.xpose.msra.mxu0 0.0
    %626 = vmatprep.subr.mxu0 0.0
    %627 = vmatpush1.xpose.msra.mxu0 0.0
    %628 = vmatprep.subr.mxu0 0.0
    %629 = vmatpush1.xpose.msra.mxu0 0.0
    %630 = vmatprep.subr.mxu0 0.0
    %631 = vmatpush1.xpose.msra.mxu0 0.0
    %632 = vmatprep.subr.mxu0 0.0
    %633 = vmatpush1.xpose.msra.mxu0 0.0
    %634 = vmatprep.subr.mxu0 0.0
    %635 = vmatpush1.xpose.msra.mxu0 0.0
    %636 = vmatprep.subr.mxu0 0.0
    %637 = vmatpush1.xpose.msra.mxu0 0.0
    %638 = vmatprep.subr.mxu0 0.0
    %639 = vmatpush1.xpose.msra.mxu0 0.0
    %640 = vmatprep.subr.mxu0 0.0
    %641 = vmatpush1.xpose.msra.mxu0 0.0
    %642 = vmatprep.subr.mxu0 0.0
    %643 = vmatpush1.xpose.msra.mxu0 0.0
    %644 = vmatprep.subr.mxu0 0.0
    %645 = vmatpush1.xpose.msra.mxu0 0.0
    %646 = vmatprep.subr.mxu0 0.0
    %647 = vmatpush1.xpose.msra.mxu0 0.0
    %648 = vmatprep.subr.mxu0 0.0
    %649 = vmatpush1.xpose.msra.mxu0 0.0
    %650 = vmatprep.subr.mxu0 0.0
    %651 = vmatpush1.xpose.msra.mxu0 0.0
    %652 = vmatprep.subr.mxu0 0.0
    %653 = vmatpush1.xpose.msra.mxu0 0.0
    %654 = vmatprep.subr.mxu0 0.0
    %655 = vmatpush1.xpose.msra.mxu0 0.0
    %656 = vmatprep.subr.mxu0 0.0
    %657 = vmatpush1.xpose.msra.mxu0 0.0
    %658 = vmatprep.subr.mxu0 0.0
    %659 = vmatpush1.xpose.msra.mxu0 0.0
    %660 = vmatprep.subr.mxu0 0.0
    %661 = vmatpush1.xpose.msra.mxu0 0.0
    %662 = vmatprep.subr.mxu0 0.0
    %663 = vmatpush1.xpose.msra.mxu0 0.0
    %664 = vmatprep.subr.mxu0 0.0
    %665 = vmatpush1.xpose.msra.mxu0 0.0
    %666 = vmatprep.subr.mxu0 0.0
    %667 = vmatpush1.xpose.msra.mxu0 0.0
    %668 = vmatprep.subr.mxu0 0.0
    %669 = vmatpush1.xpose.msra.mxu0 0.0
    %670 = vmatprep.subr.mxu0 0.0
    %671 = vmatpush1.xpose.msra.mxu0 0.0
    %672 = vmatprep.subr.mxu0 0.0
    %673 = vmatpush1.xpose.msra.mxu0 0.0
    %674 = vmatprep.subr.mxu0 0.0
    %675 = vmatpush1.xpose.msra.mxu0 0.0
    %676 = vmatprep.subr.mxu0 0.0
    %677 = vmatpush1.xpose.msra.mxu0 0.0
    %678 = vmatprep.subr.mxu0 0.0
    %679 = vmatpush1.xpose.msra.mxu0 0.0
    %680 = vmatprep.mubr.f32.mxu0 0.0
    %681 = vmatmul.mubr.f32.gmra.mrb[0].mxu0 %v611
    %v682 = vpop.f32.mrb[0].mxu0
    %v683 = vadd.f32 0.0, %v682
    %v684 = vpop.f32.mrb[0].mxu0
    %685 = vdwg.mxu0
    %v686 = vsel %vm498, %v683, -inf
    %687 = vmax.xlane.f32.xlu0 %v686
    %v688 = vpop.xlane.xlu0 %687
    %v689 = vsub.f32 %v683, %v688
    %v690 = vmul.f32 %v689, 1.442695
    %v691 = vpow.pop %v690
    %v692 = vsel %vm498, %v691, 0.0
    %693 = vadd.xlane.f32.xlu0 %v692
    %v694 = vpop.xlane.xlu0 %693
    %v695 = vrcp.pop %v694
    %v696 = vmul.f32 %v691, %v695
    %s697 = scalar_lea.vmem [#allocation4], 16
    %698 = vst.msk [vmem:[%s697] sm:$0xff] %vm498, %v696
    %s699 = sadd.s32 %s511, 16
    %s700 = scalar_lea.vmem [#allocation2], %s699
    %v701 = vld [vmem:[%s700] sm:$0xff]
    %s702 = scalar_lea.vmem [#allocation3], 24
    %v703 = vld [vmem:[%s702] sm:$0xff]
    %v705 = vsel %vm421, %v701, 0
    %v708 = vsel %vm421, %v703, 0
    %710 = vmatprep.subr.mxu0 0.0
    %711 = vmatpush1.xpose.msra.mxu0 %v708
    %712 = vmatprep.subr.mxu0 0.0
    %713 = vmatpush1.xpose.msra.mxu0 0.0
    %714 = vmatprep.subr.mxu0 0.0
    %715 = vmatpush1.xpose.msra.mxu0 0.0
    %716 = vmatprep.subr.mxu0 0.0
    %717 = vmatpush1.xpose.msra.mxu0 0.0
    %718 = vmatprep.subr.mxu0 0.0
    %719 = vmatpush1.xpose.msra.mxu0 0.0
    %720 = vmatprep.subr.mxu0 0.0
    %721 = vmatpush1.xpose.msra.mxu0 0.0
    %722 = vmatprep.subr.mxu0 0.0
    %723 = vmatpush1.xpose.msra.mxu0 0.0
    %724 = vmatprep.subr.mxu0 0.0
    %725 = vmatpush1.xpose.msra.mxu0 0.0
    %726 = vmatprep.subr.mxu0 0.0
    %727 = vmatpush1.xpose.msra.mxu0 0.0
    %728 = vmatprep.subr.mxu0 0.0
    %729 = vmatpush1.xpose.msra.mxu0 0.0
    %730 = vmatprep.subr.mxu0 0.0
    %731 = vmatpush1.xpose.msra.mxu0 0.0
    %732 = vmatprep.subr.mxu0 0.0
    %733 = vmatpush1.xpose.msra.mxu0 0.0
    %734 = vmatprep.subr.mxu0 0.0
    %735 = vmatpush1.xpose.msra.mxu0 0.0
    %736 = vmatprep.subr.mxu0 0.0
    %737 = vmatpush1.xpose.msra.mxu0 0.0
    %738 = vmatprep.subr.mxu0 0.0
    %739 = vmatpush1.xpose.msra.mxu0 0.0
    %740 = vmatprep.subr.mxu0 0.0
    %741 = vmatpush1.xpose.msra.mxu0 0.0
    %742 = vmatprep.subr.mxu0 0.0
    %743 = vmatpush1.xpose.msra.mxu0 0.0
    %744 = vmatprep.subr.mxu0 0.0
    %745 = vmatpush1.xpose.msra.mxu0 0.0
    %746 = vmatprep.subr.mxu0 0.0
    %747 = vmatpush1.xpose.msra.mxu0 0.0
    %748 = vmatprep.subr.mxu0 0.0
    %749 = vmatpush1.xpose.msra.mxu0 0.0
    %750 = vmatprep.subr.mxu0 0.0
    %751 = vmatpush1.xpose.msra.mxu0 0.0
    %752 = vmatprep.subr.mxu0 0.0
    %753 = vmatpush1.xpose.msra.mxu0 0.0
    %754 = vmatprep.subr.mxu0 0.0
    %755 = vmatpush1.xpose.msra.mxu0 0.0
    %756 = vmatprep.subr.mxu0 0.0
    %757 = vmatpush1.xpose.msra.mxu0 0.0
    %758 = vmatprep.subr.mxu0 0.0
    %759 = vmatpush1.xpose.msra.mxu0 0.0
    %760 = vmatprep.subr.mxu0 0.0
    %761 = vmatpush1.xpose.msra.mxu0 0.0
    %762 = vmatprep.subr.mxu0 0.0
    %763 = vmatpush1.xpose.msra.mxu0 0.0
    %764 = vmatprep.subr.mxu0 0.0
    %765 = vmatpush1.xpose.msra.mxu0 0.0
    %766 = vmatprep.subr.mxu0 0.0
    %767 = vmatpush1.xpose.msra.mxu0 0.0
    %768 = vmatprep.subr.mxu0 0.0
    %769 = vmatpush1.xpose.msra.mxu0 0.0
    %770 = vmatprep.subr.mxu0 0.0
    %771 = vmatpush1.xpose.msra.mxu0 0.0
    %772 = vmatprep.subr.mxu0 0.0
    %773 = vmatpush1.xpose.msra.mxu0 0.0
    %774 = vmatprep.mubr.f32.mxu0 0.0
    %775 = vmatmul.mubr.f32.gmra.mrb[0].mxu0 %v705
    %v776 = vpop.f32.mrb[0].mxu0
    %v777 = vadd.f32 0.0, %v776
    %v778 = vpop.f32.mrb[0].mxu0
    %779 = vdwg.mxu0
    %v780 = vsel %vm498, %v777, -inf
    %781 = vmax.xlane.f32.xlu0 %v780
    %v782 = vpop.xlane.xlu0 %781
    %v783 = vsub.f32 %v777, %v782
    %v784 = vmul.f32 %v783, 1.442695
    %v785 = vpow.pop %v784
    %v786 = vsel %vm498, %v785, 0.0
    %787 = vadd.xlane.f32.xlu0 %v786
    %v788 = vpop.xlane.xlu0 %787
    %v789 = vrcp.pop %v788
    %v790 = vmul.f32 %v785, %v789
    %s791 = scalar_lea.vmem [#allocation4], 24
    %792 = vst.msk [vmem:[%s791] sm:$0xff] %vm498, %v790
    // Predicated region
    $region18: #{relation_graph_forward.1} parent=1 // pred_check
      _
    $region19: #{relation_graph_forward.1} parent=1 // pred_check_branch
      %794 = sbr.rel (0) target = $region21
    $region20: #{relation_graph_forward.1} parent=1 // pred_region
      %s796 = ssub.s32 512, 512
      %797 = vsyncadd [#allocation5], %s796
      %s798 = sshll.u32 [#allocation4], 4
      %s799 = int_to_ptr.vmem [resolvable:$true] %s798
      %804 = dma.vmem_to_hbm [thread:$0]  %s799, 512, %s3, [#allocation5], 128, 128, 8
    $region21: #{relation_graph_forward.1} parent=1 // pred_fallthru
      _
    // Predicated region
    $region22: #{relation_graph_forward.1} parent=1 // pred_check
      _
    $region23: #{relation_graph_forward.1} parent=1 // pred_check_branch
      %806 = sbr.rel (0) target = $region25
    $region24: #{relation_graph_forward.1} parent=1 // pred_region
      %807 = dma.done [#allocation5], 512
    $region25: #{relation_graph_forward.1} parent=1 // pred_fallthru
      _
    %808 = vsyncpa [#allocation5], 1

</llo_original>
